<compile_context>
chip_gen: v7x
topology: tpu7x:2x2x1
jax: 0.10.0
libtpu: 0.0.40
codegen_flags: <defaults>
</compile_context>

<pallas_src>
import functools

import jax
import jax.numpy as jnp
from jax.experimental import pallas as pl
from jax.experimental.pallas import tpu as pltpu


def _round_up(x, m):
    return ((x + m - 1) // m) * m


def _round_down(x, m):
    return (x // m) * m


def _fusion_kernel(x1_ref, x2_ref, w_ref, b_ref, o_ref, *,
                   fuse_concat, compute_dtype, blend_dtype):
    x1 = x1_ref[...]
    x2 = x2_ref[...]
    x1c = x1.astype(compute_dtype)
    x2c = x2.astype(compute_dtype)

    # gate pre-activation: concat([x1, x2]) @ W_t + b,   W_t in (in, out) layout.
    if fuse_concat:
        # One K=2D dot fills the 256-wide MXU contraction on v6e/v7x; the
        # in-VMEM concat is a cheap (tm, 2D) copy for small D.
        xcat = jnp.concatenate([x1c, x2c], axis=-1)
        z = jnp.dot(xcat, w_ref[...], preferred_element_type=jnp.float32)
    else:
        d = x1.shape[-1]
        z = jnp.dot(x1c, w_ref[pl.ds(0, d), :],
                    preferred_element_type=jnp.float32)
        z = z + jnp.dot(x2c, w_ref[pl.ds(d, d), :],
                        preferred_element_type=jnp.float32)

    z = z + b_ref[...]
    gate = jax.nn.sigmoid(z)  # transcendental -> EUP slot (nearly free)
    # TODO(synk): nn.Dropout(0.1) is identity in eval mode; a training-mode mask
    # would need pltpu.prng_seed/prng_random_bits and is intentionally omitted.

    g = gate.astype(blend_dtype)
    a1 = x1.astype(blend_dtype)
    a2 = x2.astype(blend_dtype)
    # gate*x1 + (1-gate)*x2  ==  x2 + gate*(x1 - x2)   (one fewer VPU mul)
    o_ref[...] = (a2 + g * (a1 - a2)).astype(o_ref.dtype)


def _vmem_limit_bytes():
    """~80% of physical per-core VMEM (v7x: ~51 MiB, v5e/v6e: ~102 MiB)."""
    try:
        phys = int(pltpu.get_tpu_info().vmem_capacity_bytes)
    except Exception:
        phys = 64 * 1024 * 1024  # conservative fallback (v7x per-TC size)
    return int(phys * 0.80)


def _pick_tm(M, D, itemsize, vmem_limit):
    """Largest MXU-aligned TM whose pipeline fits within vmem_limit."""
    # Resident: single-buffered (2D, D) weight + bias.
    resident = 2 * D * D * itemsize + _round_up(D, 128) * 4
    # Streamed: x1, x2, out -> 3 arrays x 2 buffers; keep ~40% headroom for
    # in-kernel f32 temps (z / gate / blend) and compiler internal scratch.
    tile_budget = max(int((vmem_limit - resident) * 0.6), 6 * 8 * D * itemsize)
    tm = tile_budget // (6 * D * itemsize)
    tm = min(tm, 2048 if D <= 512 else 1024)
    if tm >= 256:
        tm = _round_down(tm, 256)   # MXU-aligned rows (also 128-aligned on v5e)
    else:
        tm = max(8, _round_down(tm, 8))
    tm = min(tm, _round_up(M, 8))   # never exceed the (8-rounded) row count
    return int(tm)


def _resident_spec(shape, single_buffered):
    """Constant-index resident operand; single-buffered when supported."""
    idx = lambda i: (0,) * len(shape)
    if single_buffered and hasattr(pl, "Buffered"):
        try:
            return pl.BlockSpec(shape, idx, pipeline_mode=pl.Buffered(1))
        except TypeError:
            pass
    return pl.BlockSpec(shape, idx)


def dynamic_gated_fusion(input1, input2, weight, bias, *, matmul_dtype=None):
    """input1, input2: (B, S, D). weight: (D, 2D) torch layout. bias: (D,).

    matmul_dtype: optional dtype (e.g. jnp.bfloat16) for the MXU dots when
    activations arrive as f32; default keeps the activation dtype (exact f32).
    """
    B, S, D = input1.shape
    M = B * S
    dtype = input1.dtype
    compute_dtype = jnp.dtype(matmul_dtype) if matmul_dtype is not None else jnp.dtype(dtype)
    itemsize = max(jnp.dtype(dtype).itemsize, jnp.dtype(compute_dtype).itemsize)

    x1 = input1.reshape(M, D)
    x2 = input2.reshape(M, D)

    # One-time host transpose to (in, out) layout: rows [0, D) pair with x1,
    # rows [D, 2D) with x2.  No per-grid-step weight transpose in the kernel.
    w_t = weight.T.astype(compute_dtype)           # (2D, D)
    b = bias.reshape(1, D).astype(jnp.float32)

    vmem_limit = _vmem_limit_bytes()
    tm = _pick_tm(M, D, itemsize, vmem_limit)
    grid = (pl.cdiv(M, tm),)   # ragged last block: OOB rows masked on write

    # NOTE: for D < 128 lanes / MXU columns are underfilled; production shapes
    # should keep D a multiple of 128.
    fuse_concat = D <= 128
    blend_dtype = dtype if jnp.dtype(dtype) == jnp.dtype(jnp.bfloat16) else jnp.float32

    kernel = functools.partial(
        _fusion_kernel, fuse_concat=fuse_concat,
        compute_dtype=compute_dtype, blend_dtype=blend_dtype)

    # TODO(synk): for very large D (2*D*D*itemsize approaching the VMEM budget,
    # ~1.5-2K bf16 on v7x) add a second "parallel" grid axis over the output
    # feature dim with N-tiled weight/bias/output blocks.

    def run(single_buffer_residents):
        in_specs = [
            pl.BlockSpec((tm, D), lambda i: (i, 0)),                     # x1 tile
            pl.BlockSpec((tm, D), lambda i: (i, 0)),                     # x2 tile
            _resident_spec((2 * D, D), single_buffer_residents),         # W (in,out)
            _resident_spec((1, D), single_buffer_residents),             # bias
        ]
        return pl.pallas_call(
            kernel,
            out_shape=jax.ShapeDtypeStruct((M, D), dtype),
            grid_spec=pltpu.PrefetchScalarGridSpec(
                num_scalar_prefetch=0,
                grid=grid,
                in_specs=in_specs,
                out_specs=pl.BlockSpec((tm, D), lambda i: (i, 0)),
            ),
            compiler_params=pltpu.CompilerParams(
                dimension_semantics=("parallel",),   # M loop sharded across TCs
                vmem_limit_bytes=vmem_limit,
            ),
        )(x1, x2, w_t, b)

    try:
        out = run(True)
    except Exception:
        # Fallback for jax versions without pipeline_mode single-buffering.
        out = run(False)

    return out.reshape(B, S, D)


def _reference(input1, input2, weight, bias):
    concat = jnp.concatenate([input1, input2], axis=-1)
    gate = jax.nn.sigmoid(concat @ weight.T + bias)
    return gate * input1 + (1.0 - gate) * input2


if __name__ == "__main__":
    B, S, D = 2, 8, 32
    key = jax.random.PRNGKey(0)
    k1, k2, kw, kb = jax.random.split(key, 4)

    input1 = jax.random.normal(k1, (B, S, D), dtype=jnp.float32)
    input2 = jax.random.normal(k2, (B, S, D), dtype=jnp.float32)

    # Deterministic parameters matching nn.Linear(2*dim, dim) init scheme.
    bound = 1.0 / jnp.sqrt(2.0 * D)
    weight = jax.random.uniform(kw, (D, 2 * D), minval=-bound, maxval=bound,
                                dtype=jnp.float32)
    bias = jax.random.uniform(kb, (D,), minval=-bound, maxval=bound,
                              dtype=jnp.float32)

    out = dynamic_gated_fusion(input1, input2, weight, bias)
    out = jax.block_until_ready(out)

    ref = _reference(input1, input2, weight, bias)
    assert out.shape == (B, S, D)
    assert jnp.allclose(out, ref, atol=1e-5, rtol=1e-5)

    print("KERNEL_OK")
</pallas_src>

<mosaic_0001>
module attributes {stable_mosaic.version = 11 : i64} {
  func.func @_fusion_kernel(%arg0: i32, %arg1: memref<16x32xf32, #tpu.memory_space<vmem>>, %arg2: memref<16x32xf32, #tpu.memory_space<vmem>>, %arg3: memref<64x32xf32, #tpu.memory_space<vmem>>, %arg4: memref<1x32xf32, #tpu.memory_space<vmem>>, %arg5: memref<16x32xf32, #tpu.memory_space<vmem>>) attributes {dimension_semantics = [#tpu.dimension_semantics<parallel>], iteration_bounds = array<i64: 1>, scalar_prefetch = 0 : i64, scratch_operands = 0 : i64, tpu.core_type = #tpu.core_type<tc>, window_params = [{transform_indices = @transform_0, window_bounds = array<i64: 16, 32>}, {transform_indices = @transform_1, window_bounds = array<i64: 16, 32>}, {pipeline_mode = #tpu.pipeline_mode<synchronous>, transform_indices = @transform_2, window_bounds = array<i64: 64, 32>}, {pipeline_mode = #tpu.pipeline_mode<synchronous>, transform_indices = @transform_3, window_bounds = array<i64: 1, 32>}, {transform_indices = @transform_4, window_bounds = array<i64: 16, 32>}]} {
    %c0 = arith.constant 0 : index
    %c0_0 = arith.constant 0 : index
    %0 = vector.load %arg1[%c0, %c0_0] : memref<16x32xf32, #tpu.memory_space<vmem>>, vector<16x32xf32>
    %c0_1 = arith.constant 0 : index
    %c0_2 = arith.constant 0 : index
    %1 = vector.load %arg2[%c0_1, %c0_2] : memref<16x32xf32, #tpu.memory_space<vmem>>, vector<16x32xf32>
    %2 = tpu.concatenate %0, %1 in 1 : vector<16x32xf32>, vector<16x32xf32> -> vector<16x64xf32>
    %c0_3 = arith.constant 0 : index
    %c0_4 = arith.constant 0 : index
    %3 = vector.load %arg3[%c0_3, %c0_4] : memref<64x32xf32, #tpu.memory_space<vmem>>, vector<64x32xf32>
    %cst = arith.constant dense<0.000000e+00> : vector<16x32xf32>
    %4 = tpu.matmul %2, %3, %cst {dimension_numbers = #tpu.dot_dimension_numbers<[1], [0], [0], [1], [0, 0, 1, 1], [], []>} : vector<16x64xf32>, vector<64x32xf32>, vector<16x32xf32> -> vector<16x32xf32>
    %c0_5 = arith.constant 0 : index
    %c0_6 = arith.constant 0 : index
    %5 = vector.load %arg4[%c0_5, %c0_6] : memref<1x32xf32, #tpu.memory_space<vmem>>, vector<1x32xf32>
    %6 = vector.broadcast %5 : vector<1x32xf32> to vector<16x32xf32>
    %7 = arith.addf %4, %6 : vector<16x32xf32>
    %8 = arith.negf %7 : vector<16x32xf32>
    %9 = math.exp %8 : vector<16x32xf32>
    %cst_7 = arith.constant 1.000000e+00 : f32
    %10 = vector.broadcast %cst_7 : f32 to vector<16x32xf32>
    %11 = arith.addf %10, %9 : vector<16x32xf32>
    %12 = arith.divf %10, %11 : vector<16x32xf32>
    %13 = arith.subf %0, %1 : vector<16x32xf32>
    %14 = arith.mulf %12, %13 : vector<16x32xf32>
    %15 = arith.addf %1, %14 : vector<16x32xf32>
    %c0_8 = arith.constant 0 : index
    %c0_9 = arith.constant 0 : index
    %16 = vector.load %arg5[%c0_8, %c0_9] : memref<16x32xf32, #tpu.memory_space<vmem>>, vector<16x32xf32>
    tpu.vector_store %arg5[%c0_8, %c0_9], %15 {strides = array<i32>} : memref<16x32xf32, #tpu.memory_space<vmem>>, vector<16x32xf32>,
    return
  }
  func.func @transform_0(%arg0: i32) -> (i32, i32) {
    %c0_i32 = arith.constant 0 : i32
    %c0_i32_0 = arith.constant 0 : i32
    return %arg0, %c0_i32 : i32, i32
  }
  func.func @transform_1(%arg0: i32) -> (i32, i32) {
    %c0_i32 = arith.constant 0 : i32
    %c0_i32_0 = arith.constant 0 : i32
    return %arg0, %c0_i32 : i32, i32
  }
  func.func @transform_2(%arg0: i32) -> (i32, i32) {
    %c0_i32 = arith.constant 0 : i32
    %c0_i32_0 = arith.constant 0 : i32
    %c0_i32_1 = arith.constant 0 : i32
    return %c0_i32, %c0_i32_0 : i32, i32
  }
  func.func @transform_3(%arg0: i32) -> (i32, i32) {
    %c0_i32 = arith.constant 0 : i32
    %c0_i32_0 = arith.constant 0 : i32
    %c0_i32_1 = arith.constant 0 : i32
    return %c0_i32, %c0_i32_0 : i32, i32
  }
  func.func @transform_4(%arg0: i32) -> (i32, i32) {
    %c0_i32 = arith.constant 0 : i32
    %c0_i32_0 = arith.constant 0 : i32
    return %arg0, %c0_i32 : i32, i32
  }
}

module attributes {stable_mosaic.version = 11 : i64} {
  func.func @_fusion_kernel(%arg0: i32, %arg1: memref<16x32xf32, #tpu.memory_space<vmem>>, %arg2: memref<16x32xf32, #tpu.memory_space<vmem>>, %arg3: memref<64x32xf32, #tpu.memory_space<vmem>>, %arg4: memref<1x32xf32, #tpu.memory_space<vmem>>, %arg5: memref<16x32xf32, #tpu.memory_space<vmem>>) attributes {dimension_semantics = [#tpu.dimension_semantics<parallel>], iteration_bounds = array<i64: 1>, scalar_prefetch = 0 : i64, scratch_operands = 0 : i64, tpu.core_type = #tpu.core_type<tc>, window_params = [{transform_indices = @transform_0, window_bounds = array<i64: 16, 32>}, {transform_indices = @transform_1, window_bounds = array<i64: 16, 32>}, {pipeline_mode = #tpu.pipeline_mode<synchronous>, transform_indices = @transform_2, window_bounds = array<i64: 64, 32>}, {pipeline_mode = #tpu.pipeline_mode<synchronous>, transform_indices = @transform_3, window_bounds = array<i64: 1, 32>}, {transform_indices = @transform_4, window_bounds = array<i64: 16, 32>}]} {
    %c0 = arith.constant 0 : index
    %c0_0 = arith.constant 0 : index
    %0 = vector.load %arg1[%c0, %c0_0] : memref<16x32xf32, #tpu.memory_space<vmem>>, vector<16x32xf32>
    %c0_1 = arith.constant 0 : index
    %c0_2 = arith.constant 0 : index
    %1 = vector.load %arg2[%c0_1, %c0_2] : memref<16x32xf32, #tpu.memory_space<vmem>>, vector<16x32xf32>
    %2 = tpu.concatenate %0, %1 in 1 : vector<16x32xf32>, vector<16x32xf32> -> vector<16x64xf32>
    %c0_3 = arith.constant 0 : index
    %c0_4 = arith.constant 0 : index
    %3 = vector.load %arg3[%c0_3, %c0_4] : memref<64x32xf32, #tpu.memory_space<vmem>>, vector<64x32xf32>
    %cst = arith.constant dense<0.000000e+00> : vector<16x32xf32>
    %4 = tpu.matmul %2, %3, %cst {dimension_numbers = #tpu.dot_dimension_numbers<[1], [0], [0], [1], [0, 0, 1, 1], [], []>} : vector<16x64xf32>, vector<64x32xf32>, vector<16x32xf32> -> vector<16x32xf32>
    %c0_5 = arith.constant 0 : index
    %c0_6 = arith.constant 0 : index
    %5 = vector.load %arg4[%c0_5, %c0_6] : memref<1x32xf32, #tpu.memory_space<vmem>>, vector<1x32xf32>
    %6 = vector.broadcast %5 : vector<1x32xf32> to vector<16x32xf32>
    %7 = arith.addf %4, %6 : vector<16x32xf32>
    %8 = arith.negf %7 : vector<16x32xf32>
    %9 = math.exp %8 : vector<16x32xf32>
    %cst_7 = arith.constant 1.000000e+00 : f32
    %10 = vector.broadcast %cst_7 : f32 to vector<16x32xf32>
    %11 = arith.addf %10, %9 : vector<16x32xf32>
    %12 = arith.divf %10, %11 : vector<16x32xf32>
    %13 = arith.subf %0, %1 : vector<16x32xf32>
    %14 = arith.mulf %12, %13 : vector<16x32xf32>
    %15 = arith.addf %1, %14 : vector<16x32xf32>
    %c0_8 = arith.constant 0 : index
    %c0_9 = arith.constant 0 : index
    %16 = vector.load %arg5[%c0_8, %c0_9] : memref<16x32xf32, #tpu.memory_space<vmem>>, vector<16x32xf32>
    tpu.vector_store %arg5[%c0_8, %c0_9], %15 {strides = array<i32>} : memref<16x32xf32, #tpu.memory_space<vmem>>, vector<16x32xf32>,
    return
  }
  func.func @transform_0(%arg0: i32) -> (i32, i32) {
    %c0_i32 = arith.constant 0 : i32
    %c0_i32_0 = arith.constant 0 : i32
    return %arg0, %c0_i32 : i32, i32
  }
  func.func @transform_1(%arg0: i32) -> (i32, i32) {
    %c0_i32 = arith.constant 0 : i32
    %c0_i32_0 = arith.constant 0 : i32
    return %arg0, %c0_i32 : i32, i32
  }
  func.func @transform_2(%arg0: i32) -> (i32, i32) {
    %c0_i32 = arith.constant 0 : i32
    %c0_i32_0 = arith.constant 0 : i32
    %c0_i32_1 = arith.constant 0 : i32
    return %c0_i32, %c0_i32_0 : i32, i32
  }
  func.func @transform_3(%arg0: i32) -> (i32, i32) {
    %c0_i32 = arith.constant 0 : i32
    %c0_i32_0 = arith.constant 0 : i32
    %c0_i32_1 = arith.constant 0 : i32
    return %c0_i32, %c0_i32_0 : i32, i32
  }
  func.func @transform_4(%arg0: i32) -> (i32, i32) {
    %c0_i32 = arith.constant 0 : i32
    %c0_i32_0 = arith.constant 0 : i32
    return %arg0, %c0_i32 : i32, i32
  }
}

</mosaic_0001>

<llo_original>
// kernel: tpu_custom_call.1
$region0: #{tpu_custom_call.1}
  #allocation0 [shape = 'u32[]', space=smem, size = 0x4, offset = 0x4, fixed_abs, tag = 'smem constant byte address 0x4 - core index']
  #allocation1 [shape = 'u32[144,128]{1,0:T(1,128)}', space=vmem, size = 0x12000, scoped, tag = 'internal scratch']
  %s0 = inlined_call_operand.vmem [shape: f32[16,32], index: 0, kind: input, shape index: {}]
  %s1 = inlined_call_operand.vmem [shape: f32[16,32], index: 1, kind: input, shape index: {}]
  %s2 = inlined_call_operand.vmem [shape: f32[64,32], index: 2, kind: input, shape index: {}]
  %s3 = inlined_call_operand.vmem [shape: f32[1,32], index: 3, kind: input, shape index: {}]
  %s4 = inlined_call_operand.hbm [shape: f32[16,32], index: 4, kind: output, shape index: {}]
  %s5 = sld [smem:[#allocation0]]
  $region26: #{tpu_custom_call.1} parent=0
    _
  %s7 = ssub.s32 1, %s5
  %s8 = scalar_select 0, %s7, %s5
  $region1: #{tpu_custom_call.1} parent=0
    #allocation2 [shape = 'u8[8192]{0}', space=vmem, size = 0x2000, scoped, tag = 'output window, operand 0, single buffered']
    #allocation3 [shape = 's32[1]{0}', space=sflag, size = 0x4, scoped, tag = 'scoped memory for tpu_custom_call.1']
    %9 = vsyncpa [#allocation3], 0
    // Predicated region
    $region2: #{tpu_custom_call.1} parent=1 // pred_check
      _
    $region3: #{tpu_custom_call.1} parent=1 // pred_check_branch
      %11 = sbr.rel (0) target = $region5
    $region4: #{tpu_custom_call.1} parent=1 // pred_region
      _
    $region5: #{tpu_custom_call.1} parent=1 // pred_fallthru
      _
    // Predicated region
    $region6: #{tpu_custom_call.1} parent=1 // pred_check
      _
    $region7: #{tpu_custom_call.1} parent=1 // pred_check_branch
      %13 = sbr.rel (0) target = $region9
    $region8: #{tpu_custom_call.1} parent=1 // pred_region
      _
    $region9: #{tpu_custom_call.1} parent=1 // pred_fallthru
      _
    // Predicated region
    $region10: #{tpu_custom_call.1} parent=1 // pred_check
      _
    $region11: #{tpu_custom_call.1} parent=1 // pred_check_branch
      %15 = sbr.rel (0) target = $region13
    $region12: #{tpu_custom_call.1} parent=1 // pred_region
      _
    $region13: #{tpu_custom_call.1} parent=1 // pred_fallthru
      _
    // Predicated region
    $region14: #{tpu_custom_call.1} parent=1 // pred_check
      _
    $region15: #{tpu_custom_call.1} parent=1 // pred_check_branch
      %17 = sbr.rel (0) target = $region17
    $region16: #{tpu_custom_call.1} parent=1 // pred_region
      _
    $region17: #{tpu_custom_call.1} parent=1 // pred_fallthru
      _
    %v18 = vld [vmem:[%s0] sm:$0xff]
    %v19 = vld [vmem:[%s0 + $0x8] sm:$0xff]
    %v20 = vld [vmem:[%s1] sm:$0xff]
    %v21 = vld [vmem:[%s1 + $0x8] sm:$0xff]
    %24 = vrot.lane.b32.xlu0 %v20, 32
    %v25 = vpop.permute.xlu0 %24
    %26 = vrot.lane.b32.xlu0 %v21, 32
    %v27 = vpop.permute.xlu0 %26
    %vm30 = vcmask 261120
    %v31 = vsel %vm30, %v18, %v25
    %v32 = vsel %vm30, %v19, %v27
    %v33 = vld [vmem:[%s2] sm:$0xff]
    %v34 = vld [vmem:[%s2 + $0x8] sm:$0xff]
    %v35 = vld [vmem:[%s2 + $0x10] sm:$0xff]
    %v36 = vld [vmem:[%s2 + $0x18] sm:$0xff]
    %v37 = vld [vmem:[%s2 + $0x20] sm:$0xff]
    %v38 = vld [vmem:[%s2 + $0x28] sm:$0xff]
    %v39 = vld [vmem:[%s2 + $0x30] sm:$0xff]
    %v40 = vld [vmem:[%s2 + $0x38] sm:$0xff]
    %v41 = vld [vmem:[%s3] sm:$0x1]
    %v43 = vlaneseq
    %v44 = vshrl.u32 %v43, 7
    %v45 = vsub.s32 0, %v44
    %v46 = vrot.slane %v41, %v45
    %vm48 = vcmask 523264
    %v50 = vsel %vm48, %v31, 0
    %v53 = vsel %vm48, %v32, 0
    %55 = vmatprep.subr.mxu0 0.0
    %56 = vmatpush1.msra.mxu0 %v33
    %57 = vmatprep.subr.mxu0 0.0
    %58 = vmatpush1.msra.mxu0 %v34
    %59 = vmatprep.subr.mxu0 0.0
    %60 = vmatpush1.msra.mxu0 %v35
    %61 = vmatprep.subr.mxu0 0.0
    %62 = vmatpush1.msra.mxu0 %v36
    %63 = vmatprep.subr.mxu0 0.0
    %64 = vmatpush1.msra.mxu0 %v37
    %65 = vmatprep.subr.mxu0 0.0
    %66 = vmatpush1.msra.mxu0 %v38
    %67 = vmatprep.subr.mxu0 0.0
    %68 = vmatpush1.msra.mxu0 %v39
    %69 = vmatprep.subr.mxu0 0.0
    %70 = vmatpush1.msra.mxu0 %v40
    %71 = vmatprep.subr.mxu0 0.0
    %72 = vmatpush1.msra.mxu0 0.0
    %73 = vmatprep.subr.mxu0 0.0
    %74 = vmatpush1.msra.mxu0 0.0
    %75 = vmatprep.subr.mxu0 0.0
    %76 = vmatpush1.msra.mxu0 0.0
    %77 = vmatprep.subr.mxu0 0.0
    %78 = vmatpush1.msra.mxu0 0.0
    %79 = vmatprep.subr.mxu0 0.0
    %80 = vmatpush1.msra.mxu0 0.0
    %81 = vmatprep.subr.mxu0 0.0
    %82 = vmatpush1.msra.mxu0 0.0
    %83 = vmatprep.subr.mxu0 0.0
    %84 = vmatpush1.msra.mxu0 0.0
    %85 = vmatprep.subr.mxu0 0.0
    %86 = vmatpush1.msra.mxu0 0.0
    %87 = vmatprep.subr.mxu0 0.0
    %88 = vmatpush1.msra.mxu0 0.0
    %89 = vmatprep.subr.mxu0 0.0
    %90 = vmatpush1.msra.mxu0 0.0
    %91 = vmatprep.subr.mxu0 0.0
    %92 = vmatpush1.msra.mxu0 0.0
    %93 = vmatprep.subr.mxu0 0.0
    %94 = vmatpush1.msra.mxu0 0.0
    %95 = vmatprep.subr.mxu0 0.0
    %96 = vmatpush1.msra.mxu0 0.0
    %97 = vmatprep.subr.mxu0 0.0
    %98 = vmatpush1.msra.mxu0 0.0
    %99 = vmatprep.subr.mxu0 0.0
    %100 = vmatpush1.msra.mxu0 0.0
    %101 = vmatprep.subr.mxu0 0.0
    %102 = vmatpush1.msra.mxu0 0.0
    %103 = vmatprep.subr.mxu0 0.0
    %104 = vmatpush1.msra.mxu0 0.0
    %105 = vmatprep.subr.mxu0 0.0
    %106 = vmatpush1.msra.mxu0 0.0
    %107 = vmatprep.subr.mxu0 0.0
    %108 = vmatpush1.msra.mxu0 0.0
    %109 = vmatprep.subr.mxu0 0.0
    %110 = vmatpush1.msra.mxu0 0.0
    %111 = vmatprep.subr.mxu0 0.0
    %112 = vmatpush1.msra.mxu0 0.0
    %113 = vmatprep.subr.mxu0 0.0
    %114 = vmatpush1.msra.mxu0 0.0
    %115 = vmatprep.subr.mxu0 0.0
    %116 = vmatpush1.msra.mxu0 0.0
    %117 = vmatprep.subr.mxu0 0.0
    %118 = vmatpush1.msra.mxu0 0.0
    %119 = vmatprep.mubr.f32.mxu0 0.0
    %120 = vmatmul.mubr.f32.gmra.mrb[0].mxu0 %v50
    %v121 = vpop.f32.mrb[0].mxu0
    %v122 = vadd.f32 %v46, %v121
    %v123 = vpop.f32.mrb[0].mxu0
    %124 = vmatprep.mubr.f32.mxu0 0.0
    %125 = vmatmul.mubr.f32.gmra.mrb[0].mxu0 %v53
    %v126 = vpop.f32.mrb[0].mxu0
    %v127 = vadd.f32 %v46, %v126
    %v128 = vpop.f32.mrb[0].mxu0
    %129 = vdwg.mxu0
    %v130 = vxor.u32 %v122, 2147483648
    %v131 = vxor.u32 %v127, 2147483648
    %v132 = vmul.f32 %v130, 1.442695
    %v133 = vpow.pop %v132
    %v134 = vmul.f32 %v131, 1.442695
    %v135 = vpow.pop %v134
    %v136 = vadd.f32 %v133, 1.0
    %v137 = vadd.f32 %v135, 1.0
    %v138 = vrcp.pop %v136
    %v139 = vmul.f32 1.0, %v138
    %v140 = vrcp.pop %v137
    %v141 = vmul.f32 1.0, %v140
    %v142 = vsub.f32 %v18, %v20
    %v143 = vsub.f32 %v19, %v21
    %v144 = vmul.f32 %v139, %v142
    %v145 = vmul.f32 %v141, %v143
    %v146 = vadd.f32 %v20, %v144
    %v147 = vadd.f32 %v21, %v145
    %148 = vst.msk [vmem:[#allocation2] sm:$0xff] %vm30, %v146
    %149 = vst.msk [vmem:[#allocation2 + $0x8] sm:$0xff] %vm30, %v147
    // Predicated region
    $region18: #{tpu_custom_call.1} parent=1 // pred_check
      _
    $region19: #{tpu_custom_call.1} parent=1 // pred_check_branch
      %151 = sbr.rel (0) target = $region21
    $region20: #{tpu_custom_call.1} parent=1 // pred_region
      %s153 = ssub.s32 256, 256
      %154 = vsyncadd [#allocation3], %s153
      %s155 = sshll.u32 [#allocation2], 4
      %s156 = int_to_ptr.vmem [resolvable:$true] %s155
      %161 = dma.vmem_to_hbm [thread:$0]  %s156, 256, %s4, [#allocation3], 128, 128, 8
    $region21: #{tpu_custom_call.1} parent=1 // pred_fallthru
      _
    // Predicated region
    $region22: #{tpu_custom_call.1} parent=1 // pred_check
      _
    $region23: #{tpu_custom_call.1} parent=1 // pred_check_branch
      %163 = sbr.rel (0) target = $region25
    $region24: #{tpu_custom_call.1} parent=1 // pred_region
      %164 = dma.done [#allocation3], 256
    $region25: #{tpu_custom_call.1} parent=1 // pred_fallthru
      _
    %165 = vsyncpa [#allocation3], 1

// kernel: tpu_custom_call.1
$region0: #{tpu_custom_call.1}
  #allocation0 [shape = 'u32[]', space=smem, size = 0x4, offset = 0x4, fixed_abs, tag = 'smem constant byte address 0x4 - core index']
  #allocation1 [shape = 'u32[144,128]{1,0:T(1,128)}', space=vmem, size = 0x12000, scoped, tag = 'internal scratch']
  %s0 = inlined_call_operand.vmem [shape: f32[16,32], index: 0, kind: input, shape index: {}]
  %s1 = inlined_call_operand.vmem [shape: f32[16,32], index: 1, kind: input, shape index: {}]
  %s2 = inlined_call_operand.vmem [shape: f32[64,32], index: 2, kind: input, shape index: {}]
  %s3 = inlined_call_operand.vmem [shape: f32[1,32], index: 3, kind: input, shape index: {}]
  %s4 = inlined_call_operand.hbm [shape: f32[16,32], index: 4, kind: output, shape index: {}]
  %s5 = sld [smem:[#allocation0]]
  $region26: #{tpu_custom_call.1} parent=0
    _
  %s7 = ssub.s32 1, %s5
  %s8 = scalar_select 0, %s7, %s5
  $region1: #{tpu_custom_call.1} parent=0
    #allocation2 [shape = 'u8[8192]{0}', space=vmem, size = 0x2000, scoped, tag = 'output window, operand 0, single buffered']
    #allocation3 [shape = 's32[1]{0}', space=sflag, size = 0x4, scoped, tag = 'scoped memory for tpu_custom_call.1']
    %9 = vsyncpa [#allocation3], 0
    // Predicated region
    $region2: #{tpu_custom_call.1} parent=1 // pred_check
      _
    $region3: #{tpu_custom_call.1} parent=1 // pred_check_branch
      %11 = sbr.rel (0) target = $region5
    $region4: #{tpu_custom_call.1} parent=1 // pred_region
      _
    $region5: #{tpu_custom_call.1} parent=1 // pred_fallthru
      _
    // Predicated region
    $region6: #{tpu_custom_call.1} parent=1 // pred_check
      _
    $region7: #{tpu_custom_call.1} parent=1 // pred_check_branch
      %13 = sbr.rel (0) target = $region9
    $region8: #{tpu_custom_call.1} parent=1 // pred_region
      _
    $region9: #{tpu_custom_call.1} parent=1 // pred_fallthru
      _
    // Predicated region
    $region10: #{tpu_custom_call.1} parent=1 // pred_check
      _
    $region11: #{tpu_custom_call.1} parent=1 // pred_check_branch
      %15 = sbr.rel (0) target = $region13
    $region12: #{tpu_custom_call.1} parent=1 // pred_region
      _
    $region13: #{tpu_custom_call.1} parent=1 // pred_fallthru
      _
    // Predicated region
    $region14: #{tpu_custom_call.1} parent=1 // pred_check
      _
    $region15: #{tpu_custom_call.1} parent=1 // pred_check_branch
      %17 = sbr.rel (0) target = $region17
    $region16: #{tpu_custom_call.1} parent=1 // pred_region
      _
    $region17: #{tpu_custom_call.1} parent=1 // pred_fallthru
      _
    %v18 = vld [vmem:[%s0] sm:$0xff]
    %v19 = vld [vmem:[%s0 + $0x8] sm:$0xff]
    %v20 = vld [vmem:[%s1] sm:$0xff]
    %v21 = vld [vmem:[%s1 + $0x8] sm:$0xff]
    %24 = vrot.lane.b32.xlu0 %v20, 32
    %v25 = vpop.permute.xlu0 %24
    %26 = vrot.lane.b32.xlu0 %v21, 32
    %v27 = vpop.permute.xlu0 %26
    %vm30 = vcmask 261120
    %v31 = vsel %vm30, %v18, %v25
    %v32 = vsel %vm30, %v19, %v27
    %v33 = vld [vmem:[%s2] sm:$0xff]
    %v34 = vld [vmem:[%s2 + $0x8] sm:$0xff]
    %v35 = vld [vmem:[%s2 + $0x10] sm:$0xff]
    %v36 = vld [vmem:[%s2 + $0x18] sm:$0xff]
    %v37 = vld [vmem:[%s2 + $0x20] sm:$0xff]
    %v38 = vld [vmem:[%s2 + $0x28] sm:$0xff]
    %v39 = vld [vmem:[%s2 + $0x30] sm:$0xff]
    %v40 = vld [vmem:[%s2 + $0x38] sm:$0xff]
    %v41 = vld [vmem:[%s3] sm:$0x1]
    %v43 = vlaneseq
    %v44 = vshrl.u32 %v43, 7
    %v45 = vsub.s32 0, %v44
    %v46 = vrot.slane %v41, %v45
    %vm48 = vcmask 523264
    %v50 = vsel %vm48, %v31, 0
    %v53 = vsel %vm48, %v32, 0
    %55 = vmatprep.subr.mxu0 0.0
    %56 = vmatpush1.msra.mxu0 %v33
    %57 = vmatprep.subr.mxu0 0.0
    %58 = vmatpush1.msra.mxu0 %v34
    %59 = vmatprep.subr.mxu0 0.0
    %60 = vmatpush1.msra.mxu0 %v35
    %61 = vmatprep.subr.mxu0 0.0
    %62 = vmatpush1.msra.mxu0 %v36
    %63 = vmatprep.subr.mxu0 0.0
    %64 = vmatpush1.msra.mxu0 %v37
    %65 = vmatprep.subr.mxu0 0.0
    %66 = vmatpush1.msra.mxu0 %v38
    %67 = vmatprep.subr.mxu0 0.0
    %68 = vmatpush1.msra.mxu0 %v39
    %69 = vmatprep.subr.mxu0 0.0
    %70 = vmatpush1.msra.mxu0 %v40
    %71 = vmatprep.subr.mxu0 0.0
    %72 = vmatpush1.msra.mxu0 0.0
    %73 = vmatprep.subr.mxu0 0.0
    %74 = vmatpush1.msra.mxu0 0.0
    %75 = vmatprep.subr.mxu0 0.0
    %76 = vmatpush1.msra.mxu0 0.0
    %77 = vmatprep.subr.mxu0 0.0
    %78 = vmatpush1.msra.mxu0 0.0
    %79 = vmatprep.subr.mxu0 0.0
    %80 = vmatpush1.msra.mxu0 0.0
    %81 = vmatprep.subr.mxu0 0.0
    %82 = vmatpush1.msra.mxu0 0.0
    %83 = vmatprep.subr.mxu0 0.0
    %84 = vmatpush1.msra.mxu0 0.0
    %85 = vmatprep.subr.mxu0 0.0
    %86 = vmatpush1.msra.mxu0 0.0
    %87 = vmatprep.subr.mxu0 0.0
    %88 = vmatpush1.msra.mxu0 0.0
    %89 = vmatprep.subr.mxu0 0.0
    %90 = vmatpush1.msra.mxu0 0.0
    %91 = vmatprep.subr.mxu0 0.0
    %92 = vmatpush1.msra.mxu0 0.0
    %93 = vmatprep.subr.mxu0 0.0
    %94 = vmatpush1.msra.mxu0 0.0
    %95 = vmatprep.subr.mxu0 0.0
    %96 = vmatpush1.msra.mxu0 0.0
    %97 = vmatprep.subr.mxu0 0.0
    %98 = vmatpush1.msra.mxu0 0.0
    %99 = vmatprep.subr.mxu0 0.0
    %100 = vmatpush1.msra.mxu0 0.0
    %101 = vmatprep.subr.mxu0 0.0
    %102 = vmatpush1.msra.mxu0 0.0
    %103 = vmatprep.subr.mxu0 0.0
    %104 = vmatpush1.msra.mxu0 0.0
    %105 = vmatprep.subr.mxu0 0.0
    %106 = vmatpush1.msra.mxu0 0.0
    %107 = vmatprep.subr.mxu0 0.0
    %108 = vmatpush1.msra.mxu0 0.0
    %109 = vmatprep.subr.mxu0 0.0
    %110 = vmatpush1.msra.mxu0 0.0
    %111 = vmatprep.subr.mxu0 0.0
    %112 = vmatpush1.msra.mxu0 0.0
    %113 = vmatprep.subr.mxu0 0.0
    %114 = vmatpush1.msra.mxu0 0.0
    %115 = vmatprep.subr.mxu0 0.0
    %116 = vmatpush1.msra.mxu0 0.0
    %117 = vmatprep.subr.mxu0 0.0
    %118 = vmatpush1.msra.mxu0 0.0
    %119 = vmatprep.mubr.f32.mxu0 0.0
    %120 = vmatmul.mubr.f32.gmra.mrb[0].mxu0 %v50
    %v121 = vpop.f32.mrb[0].mxu0
    %v122 = vadd.f32 %v46, %v121
    %v123 = vpop.f32.mrb[0].mxu0
    %124 = vmatprep.mubr.f32.mxu0 0.0
    %125 = vmatmul.mubr.f32.gmra.mrb[0].mxu0 %v53
    %v126 = vpop.f32.mrb[0].mxu0
    %v127 = vadd.f32 %v46, %v126
    %v128 = vpop.f32.mrb[0].mxu0
    %129 = vdwg.mxu0
    %v130 = vxor.u32 %v122, 2147483648
    %v131 = vxor.u32 %v127, 2147483648
    %v132 = vmul.f32 %v130, 1.442695
    %v133 = vpow.pop %v132
    %v134 = vmul.f32 %v131, 1.442695
    %v135 = vpow.pop %v134
    %v136 = vadd.f32 %v133, 1.0
    %v137 = vadd.f32 %v135, 1.0
    %v138 = vrcp.pop %v136
    %v139 = vmul.f32 1.0, %v138
    %v140 = vrcp.pop %v137
    %v141 = vmul.f32 1.0, %v140
    %v142 = vsub.f32 %v18, %v20
    %v143 = vsub.f32 %v19, %v21
    %v144 = vmul.f32 %v139, %v142
    %v145 = vmul.f32 %v141, %v143
    %v146 = vadd.f32 %v20, %v144
    %v147 = vadd.f32 %v21, %v145
    %148 = vst.msk [vmem:[#allocation2] sm:$0xff] %vm30, %v146
    %149 = vst.msk [vmem:[#allocation2 + $0x8] sm:$0xff] %vm30, %v147
    // Predicated region
    $region18: #{tpu_custom_call.1} parent=1 // pred_check
      _
    $region19: #{tpu_custom_call.1} parent=1 // pred_check_branch
      %151 = sbr.rel (0) target = $region21
    $region20: #{tpu_custom_call.1} parent=1 // pred_region
      %s153 = ssub.s32 256, 256
      %154 = vsyncadd [#allocation3], %s153
      %s155 = sshll.u32 [#allocation2], 4
      %s156 = int_to_ptr.vmem [resolvable:$true] %s155
      %161 = dma.vmem_to_hbm [thread:$0]  %s156, 256, %s4, [#allocation3], 128, 128, 8
    $region21: #{tpu_custom_call.1} parent=1 // pred_fallthru
      _
    // Predicated region
    $region22: #{tpu_custom_call.1} parent=1 // pred_check
      _
    $region23: #{tpu_custom_call.1} parent=1 // pred_check_branch
      %163 = sbr.rel (0) target = $region25
    $region24: #{tpu_custom_call.1} parent=1 // pred_region
      %164 = dma.done [#allocation3], 256
    $region25: #{tpu_custom_call.1} parent=1 // pred_fallthru
      _
    %165 = vsyncpa [#allocation3], 1

</llo_original>
